<compile_context>
chip_gen: v7x
topology: tpu7x:2x2x1
jax: 0.10.0
libtpu: 0.0.40
codegen_flags: <defaults>
</compile_context>

<pallas_src>
import jax
import jax.numpy as jnp
from jax import lax
from jax.experimental import pallas as pl
from jax.experimental.pallas import tpu as pltpu

EPS = 1e-5


def _round_up(x, m):
    return ((x + m - 1) // m) * m


def conv_block_forward(x, weight, bias, gamma, beta, stride):
    """x: (N, C_in, L) f32; weight: (C_out, C_in, K); returns (N, C_out, L_out)."""
    del bias  # cancelled exactly by training-mode BatchNorm's mean subtraction
    N, C_in, L = x.shape
    C_out, _, K = weight.shape
    assert 1 <= K <= 128 and stride >= 1
    L_out = (L - K) // stride + 1
    assert L_out >= 1

    C_out_p = _round_up(C_out, 8)
    C_in_p = _round_up(C_in, 8)
    TL = min(1024, _round_up(L_out, 128))     # lane tile over output positions
    n_lt = (L_out + TL - 1) // TL
    L_out_p = n_lt * TL
    HALO = 128                                # covers tap shifts d = k//stride <= 127
    Lq_p = L_out_p + HALO                     # decimated length incl. halo columns

    # ---- stride-phase re-layout of x (wrapper glue, ~2*|x| of HBM traffic) ----
    # x_ph[n, p, c, q] = x[n, c, q*stride + p]; zero-padded past L.
    x_pad = jnp.pad(x, ((0, 0), (0, 0), (0, Lq_p * stride - L)))
    x_ph = x_pad.reshape(N, C_in, Lq_p, stride).transpose(0, 3, 1, 2)
    x_ph = jnp.pad(x_ph, ((0, 0), (0, 0), (0, C_in_p - C_in), (0, 0)))

    # Per-tap weight slabs: w_taps[k] = weight[:, :, k], zero-padded (resident in VMEM).
    w_taps = jnp.pad(jnp.transpose(weight, (2, 0, 1)),
                     ((0, 0), (0, C_out_p - C_out), (0, C_in_p - C_in)))

    # ---- kernels (closures over static shape parameters) ----
    def conv_tile(w_ref, xc_ref, xh_ref):
        """Pre-BN conv output (C_out_p, TL) for the current (n, lt) tile."""
        # NOTE: for very large C_out_p*TL the accumulator spills to VMEM; that
        # traffic stays hidden under the HBM-bound pipeline.
        acc = jnp.zeros((C_out_p, TL), jnp.float32)
        for p in range(min(stride, K)):
            cur = xc_ref[0, p]                                   # (C_in_p, TL)
            win = None
            if p + stride < K:                                   # some tap needs halo
                win = jnp.concatenate([cur, xh_ref[0, p]], axis=1)   # (C_in_p, TL+HALO)
            for k in range(p, K, stride):
                d = k // stride
                if d == 0:
                    xs = cur
                else:  # shift the window left by d via an XLU rotate (static shift)
                    xs = pltpu.roll(win, shift=(TL + HALO) - d, axis=1)[:, :TL]
                acc = acc + jnp.dot(w_ref[k], xs, preferred_element_type=jnp.float32)
        return acc

    def stats_kernel(w_ref, xc_ref, xh_ref, stat_ref):
        y = conv_tile(w_ref, xc_ref, xh_ref)
        lt = pl.program_id(1)
        valid = L_out - lt * TL                                   # traced int32
        cnt = jnp.minimum(TL, valid).astype(jnp.float32)
        mask = lax.broadcasted_iota(jnp.int32, (1, TL), 1) < valid
        y_m = jnp.where(mask, y, 0.0)
        s = jnp.sum(y_m, axis=1, keepdims=True)                   # (C_out_p, 1)
        mu = s / cnt
        dev = jnp.where(mask, y - mu, 0.0)
        m2 = jnp.sum(dev * dev, axis=1, keepdims=True)            # tile-centered SSQ
        stat_ref[0, 0, :, :] = jnp.concatenate([s, m2], axis=1)

    def conv_bn_relu_kernel(w_ref, ss_ref, xc_ref, xh_ref, o_ref):
        y = conv_tile(w_ref, xc_ref, xh_ref)
        out = jnp.maximum(y * ss_ref[:, 0:1] + ss_ref[:, 1:2], 0.0)
        o_ref[0, :, :] = out.astype(o_ref.dtype)

    w_spec = pl.BlockSpec((K, C_out_p, C_in_p), lambda n, lt: (0, 0, 0))
    xcur_spec = pl.BlockSpec((1, stride, C_in_p, TL), lambda n, lt: (n, 0, 0, lt))
    xhalo_spec = pl.BlockSpec((1, stride, C_in_p, HALO),
                              lambda n, lt: (n, 0, 0, (lt + 1) * (TL // HALO)))

    # VMEM: double-buffered blocks + in-kernel temporaries, with headroom
    # (kept well under v7x's 64 MiB per-TensorCore VMEM).
    blk = 4 * (K * C_out_p * C_in_p + stride * C_in_p * (TL + HALO)
               + C_out_p * TL + 4 * C_out_p)
    tmp = 4 * (3 * C_out_p * TL + C_in_p * (TL + HALO))
    cparams = pltpu.CompilerParams(
        dimension_semantics=("parallel", "parallel"),
        vmem_limit_bytes=int(min(max(2 * blk + tmp + (4 << 20), 16 << 20), 40 << 20)),
    )

    # ---- Pass 1: conv recompute -> per-tile [sum, tile-centered M2] partials ----
    partials = pl.pallas_call(
        stats_kernel,
        out_shape=jax.ShapeDtypeStruct((N, n_lt, C_out_p, 2), jnp.float32),
        grid_spec=pltpu.PrefetchScalarGridSpec(
            num_scalar_prefetch=0,
            grid=(N, n_lt),
            in_specs=[w_spec, xcur_spec, xhalo_spec],
            out_specs=pl.BlockSpec((1, 1, C_out_p, 2), lambda n, lt: (n, lt, 0, 0)),
        ),
        compiler_params=cparams,
    )(w_taps, x_ph, x_ph)

    # ---- Tiny glue: Chan-combine per-tile partials -> folded BN scale/shift ----
    cnts = jnp.minimum(TL, L_out - jnp.arange(n_lt) * TL).astype(jnp.float32)  # (n_lt,)
    count = jnp.float32(N * L_out)
    sums = partials[..., 0]                                       # (N, n_lt, C_out_p)
    m2s = partials[..., 1]
    mean = jnp.sum(sums, axis=(0, 1)) / count                     # (C_out_p,)
    mean_t = sums / cnts[None, :, None]
    m2_tot = jnp.sum(m2s, axis=(0, 1)) + jnp.sum(
        cnts[None, :, None] * jnp.square(mean_t - mean[None, None, :]), axis=(0, 1))
    var = jnp.maximum(m2_tot / count, 0.0)
    gamma_p = jnp.pad(gamma.astype(jnp.float32), (0, C_out_p - C_out))
    beta_p = jnp.pad(beta.astype(jnp.float32), (0, C_out_p - C_out))
    scale_v = gamma_p * lax.rsqrt(var + EPS)
    shift_v = beta_p - mean * scale_v
    scale_shift = jnp.stack([scale_v, shift_v], axis=1)           # (C_out_p, 2) resident

    # ---- Pass 2: conv recompute + folded BN + ReLU, lane-dense NCL store ----
    out_pad = pl.pallas_call(
        conv_bn_relu_kernel,
        out_shape=jax.ShapeDtypeStruct((N, C_out_p, L_out_p), jnp.float32),
        grid_spec=pltpu.PrefetchScalarGridSpec(
            num_scalar_prefetch=0,
            grid=(N, n_lt),
            in_specs=[w_spec,
                      pl.BlockSpec((C_out_p, 2), lambda n, lt: (0, 0)),
                      xcur_spec, xhalo_spec],
            out_specs=pl.BlockSpec((1, C_out_p, TL), lambda n, lt: (n, 0, lt)),
        ),
        compiler_params=cparams,
    )(w_taps, scale_shift, x_ph, x_ph)

    # Output is already NCL; just drop padding.
    return out_pad[:, :C_out, :L_out]


def _reference(x, weight, bias, gamma, beta, stride):
    """Pure-JAX reference (Conv1d + training-mode BatchNorm1d + ReLU)."""
    y = lax.conv_general_dilated(
        x, weight, window_strides=(stride,), padding="VALID",
        dimension_numbers=("NCH", "OIH", "NCH"),
    ) + bias[None, :, None]
    mean = jnp.mean(y, axis=(0, 2), keepdims=True)
    var = jnp.mean((y - mean) ** 2, axis=(0, 2), keepdims=True)
    y = (y - mean) / jnp.sqrt(var + EPS)
    y = y * gamma[None, :, None] + beta[None, :, None]
    return jnp.maximum(y, 0.0)


if __name__ == "__main__":
    # Small shapes consistent with the module: Conv1d input (N, C_in, L).
    N, C_in, L = 2, 4, 16
    C_out, K, stride = 8, 3, 2

    key = jax.random.PRNGKey(0)
    kx, kw, kb = jax.random.split(key, 3)

    x = jax.random.normal(kx, (N, C_in, L), dtype=jnp.float32)
    bound = 1.0 / (C_in * K) ** 0.5
    weight = jax.random.uniform(kw, (C_out, C_in, K), jnp.float32, -bound, bound)
    bias = jax.random.uniform(kb, (C_out,), jnp.float32, -bound, bound)
    gamma = jnp.ones((C_out,), jnp.float32)   # BatchNorm1d weight init
    beta = jnp.zeros((C_out,), jnp.float32)   # BatchNorm1d bias init

    out = conv_block_forward(x, weight, bias, gamma, beta, stride)
    out = jax.block_until_ready(out)

    ref = _reference(x, weight, bias, gamma, beta, stride)
    assert out.shape == ref.shape == (N, C_out, (L - K) // stride + 1)
    assert jnp.allclose(out, ref, atol=1e-4, rtol=1e-4)

    print("KERNEL_OK")
</pallas_src>

<mosaic_0001>
module attributes {stable_mosaic.version = 11 : i64} {
  func.func @stats_kernel(%arg0: i32, %arg1: i32, %arg2: memref<3x8x8xf32, #tpu.memory_space<vmem>>, %arg3: memref<1x2x8x128xf32, #tpu.memory_space<vmem>>, %arg4: memref<1x2x8x128xf32, #tpu.memory_space<vmem>>, %arg5: memref<1x1x8x2xf32, #tpu.memory_space<vmem>>) attributes {dimension_semantics = [#tpu.dimension_semantics<parallel>, #tpu.dimension_semantics<parallel>], iteration_bounds = array<i64: 2, 1>, scalar_prefetch = 0 : i64, scratch_operands = 0 : i64, tpu.core_type = #tpu.core_type<tc>, window_params = [{pipeline_mode = #tpu.pipeline_mode<synchronous>, transform_indices = @transform_0, window_bounds = array<i64: 3, 8, 8>}, {transform_indices = @transform_1, window_bounds = array<i64: 1, 2, 8, 128>}, {transform_indices = @transform_2, window_bounds = array<i64: 1, 2, 8, 128>}, {transform_indices = @transform_3, window_bounds = array<i64: 1, 1, 8, 2>}]} {
    %cst = arith.constant 0.000000e+00 : f32
    %0 = vector.broadcast %cst : f32 to vector<8x128xf32>
    %c0 = arith.constant 0 : index
    %c0_0 = arith.constant 0 : index
    %c0_1 = arith.constant 0 : index
    %c0_2 = arith.constant 0 : index
    %1 = vector.load %arg3[%c0, %c0_0, %c0_1, %c0_2] : memref<1x2x8x128xf32, #tpu.memory_space<vmem>>, vector<1x1x8x128xf32>
    %2 = vector.shape_cast %1 : vector<1x1x8x128xf32> to vector<8x128xf32>
    %c0_3 = arith.constant 0 : index
    %c0_4 = arith.constant 0 : index
    %c0_5 = arith.constant 0 : index
    %c0_6 = arith.constant 0 : index
    %3 = vector.load %arg4[%c0_3, %c0_4, %c0_5, %c0_6] : memref<1x2x8x128xf32, #tpu.memory_space<vmem>>, vector<1x1x8x128xf32>
    %4 = vector.shape_cast %3 : vector<1x1x8x128xf32> to vector<8x128xf32>
    %5 = tpu.concatenate %2, %4 in 1 : vector<8x128xf32>, vector<8x128xf32> -> vector<8x256xf32>
    %c0_7 = arith.constant 0 : index
    %c0_8 = arith.constant 0 : index
    %c0_9 = arith.constant 0 : index
    %6 = vector.load %arg2[%c0_7, %c0_8, %c0_9] : memref<3x8x8xf32, #tpu.memory_space<vmem>>, vector<1x8x8xf32>
    %7 = vector.shape_cast %6 : vector<1x8x8xf32> to vector<8x8xf32>
    %cst_10 = arith.constant dense<0.000000e+00> : vector<8x128xf32>
    %8 = tpu.matmul %7, %2, %cst_10 {dimension_numbers = #tpu.dot_dimension_numbers<[1], [0], [0], [1], [0, 0, 1, 1], [], []>} : vector<8x8xf32>, vector<8x128xf32>, vector<8x128xf32> -> vector<8x128xf32>
    %9 = arith.addf %0, %8 : vector<8x128xf32>
    %c255_i32 = arith.constant 255 : i32
    %10 = tpu.dynamic_rotate %5 by %c255_i32 dim 1 : vector<8x256xf32>, i32 -> vector<8x256xf32>
    %11 = vector.extract_strided_slice %10 {offsets = [0, 0], sizes = [8, 128], strides = [1, 1]} : vector<8x256xf32> to vector<8x128xf32>
    %c2 = arith.constant 2 : index
    %c0_11 = arith.constant 0 : index
    %c0_12 = arith.constant 0 : index
    %12 = vector.load %arg2[%c2, %c0_11, %c0_12] : memref<3x8x8xf32, #tpu.memory_space<vmem>>, vector<1x8x8xf32>
    %13 = vector.shape_cast %12 : vector<1x8x8xf32> to vector<8x8xf32>
    %cst_13 = arith.constant dense<0.000000e+00> : vector<8x128xf32>
    %14 = tpu.matmul %13, %11, %cst_13 {dimension_numbers = #tpu.dot_dimension_numbers<[1], [0], [0], [1], [0, 0, 1, 1], [], []>} : vector<8x8xf32>, vector<8x128xf32>, vector<8x128xf32> -> vector<8x128xf32>
    %15 = arith.addf %9, %14 : vector<8x128xf32>
    %c0_14 = arith.constant 0 : index
    %c1 = arith.constant 1 : index
    %c0_15 = arith.constant 0 : index
    %c0_16 = arith.constant 0 : index
    %16 = vector.load %arg3[%c0_14, %c1, %c0_15, %c0_16] : memref<1x2x8x128xf32, #tpu.memory_space<vmem>>, vector<1x1x8x128xf32>
    %17 = vector.shape_cast %16 : vector<1x1x8x128xf32> to vector<8x128xf32>
    %c1_17 = arith.constant 1 : index
    %c0_18 = arith.constant 0 : index
    %c0_19 = arith.constant 0 : index
    %18 = vector.load %arg2[%c1_17, %c0_18, %c0_19] : memref<3x8x8xf32, #tpu.memory_space<vmem>>, vector<1x8x8xf32>
    %19 = vector.shape_cast %18 : vector<1x8x8xf32> to vector<8x8xf32>
    %cst_20 = arith.constant dense<0.000000e+00> : vector<8x128xf32>
    %20 = tpu.matmul %19, %17, %cst_20 {dimension_numbers = #tpu.dot_dimension_numbers<[1], [0], [0], [1], [0, 0, 1, 1], [], []>} : vector<8x8xf32>, vector<8x128xf32>, vector<8x128xf32> -> vector<8x128xf32>
    %21 = arith.addf %15, %20 : vector<8x128xf32>
    %c128_i32 = arith.constant 128 : i32
    %22 = arith.muli %arg1, %c128_i32 : i32
    %c7_i32 = arith.constant 7 : i32
    %23 = arith.subi %c7_i32, %22 : i32
    %c128_i32_21 = arith.constant 128 : i32
    %24 = arith.minsi %c128_i32_21, %23 : i32
    %25 = arith.sitofp %24 : i32 to f32
    %26 = tpu.iota {dimensions = array<i32: 1>} : vector<1x128xi32>
    %27 = vector.broadcast %23 : i32 to vector<1x128xi32>
    %28 = arith.cmpi slt, %26, %27 : vector<1x128xi32>
    %cst_22 = arith.constant 0.000000e+00 : f32
    %29 = vector.shape_cast %28 : vector<1x128xi1> to vector<1x128xi1>
    %30 = vector.broadcast %29 : vector<1x128xi1> to vector<8x128xi1>
    %31 = vector.broadcast %cst_22 : f32 to vector<8x128xf32>
    %32 = arith.select %30, %21, %31 : vector<8x128xi1>, vector<8x128xf32>
    %cst_23 = arith.constant dense<0.000000e+00> : vector<8xf32>
    %33 = vector.multi_reduction <add>, %32, %cst_23 [1] : vector<8x128xf32> to vector<8xf32>
    %34 = vector.shape_cast %33 : vector<8xf32> to vector<8x1xf32>
    %35 = vector.broadcast %25 : f32 to vector<8x1xf32>
    %36 = arith.divf %34, %35 : vector<8x1xf32>
    %37 = vector.broadcast %36 : vector<8x1xf32> to vector<8x128xf32>
    %38 = arith.subf %21, %37 : vector<8x128xf32>
    %cst_24 = arith.constant 0.000000e+00 : f32
    %39 = vector.shape_cast %28 : vector<1x128xi1> to vector<1x128xi1>
    %40 = vector.broadcast %39 : vector<1x128xi1> to vector<8x128xi1>
    %41 = vector.broadcast %cst_24 : f32 to vector<8x128xf32>
    %42 = arith.select %40, %38, %41 : vector<8x128xi1>, vector<8x128xf32>
    %43 = arith.mulf %42, %42 : vector<8x128xf32>
    %cst_25 = arith.constant dense<0.000000e+00> : vector<8xf32>
    %44 = vector.multi_reduction <add>, %43, %cst_25 [1] : vector<8x128xf32> to vector<8xf32>
    %45 = vector.shape_cast %44 : vector<8xf32> to vector<8x1xf32>
    %46 = tpu.concatenate %34, %45 in 1 : vector<8x1xf32>, vector<8x1xf32> -> vector<8x2xf32>
    %c0_26 = arith.constant 0 : index
    %c0_27 = arith.constant 0 : index
    %c0_28 = arith.constant 0 : index
    %c0_29 = arith.constant 0 : index
    %47 = vector.load %arg5[%c0_26, %c0_27, %c0_28, %c0_29] : memref<1x1x8x2xf32, #tpu.memory_space<vmem>>, vector<1x1x8x2xf32>
    %48 = vector.shape_cast %47 : vector<1x1x8x2xf32> to vector<8x2xf32>
    %49 = vector.shape_cast %46 : vector<8x2xf32> to vector<1x1x8x2xf32>
    tpu.vector_store %arg5[%c0_26, %c0_27, %c0_28, %c0_29], %49 {strides = array<i32>} : memref<1x1x8x2xf32, #tpu.memory_space<vmem>>, vector<1x1x8x2xf32>,
    return
  }
  func.func @transform_0(%arg0: i32, %arg1: i32) -> (i32, i32, i32) {
    %c0_i32 = arith.constant 0 : i32
    %c0_i32_0 = arith.constant 0 : i32
    %c0_i32_1 = arith.constant 0 : i32
    %c0_i32_2 = arith.constant 0 : i32
    return %c0_i32, %c0_i32_0, %c0_i32_1 : i32, i32, i32
  }
  func.func @transform_1(%arg0: i32, %arg1: i32) -> (i32, i32, i32, i32) {
    %c0_i32 = arith.constant 0 : i32
    %c0_i32_0 = arith.constant 0 : i32
    %c0_i32_1 = arith.constant 0 : i32
    return %arg0, %c0_i32, %c0_i32_0, %arg1 : i32, i32, i32, i32
  }
  func.func @transform_2(%arg0: i32, %arg1: i32) -> (i32, i32, i32, i32) {
    %c1_i32 = arith.constant 1 : i32
    %0 = arith.addi %arg1, %c1_i32 : i32
    %c1_i32_0 = arith.constant 1 : i32
    %1 = arith.muli %0, %c1_i32_0 : i32
    %c0_i32 = arith.constant 0 : i32
    %c0_i32_1 = arith.constant 0 : i32
    %c0_i32_2 = arith.constant 0 : i32
    return %arg0, %c0_i32, %c0_i32_1, %1 : i32, i32, i32, i32
  }
  func.func @transform_3(%arg0: i32, %arg1: i32) -> (i32, i32, i32, i32) {
    %c0_i32 = arith.constant 0 : i32
    %c0_i32_0 = arith.constant 0 : i32
    %c0_i32_1 = arith.constant 0 : i32
    return %arg0, %arg1, %c0_i32, %c0_i32_0 : i32, i32, i32, i32
  }
}

</mosaic_0001>

<llo_original>
// kernel: tpu_custom_call.1
$region0: #{tpu_custom_call.1}
  #allocation0 [shape = 'u32[]', space=smem, size = 0x4, offset = 0x4, fixed_abs, tag = 'smem constant byte address 0x4 - core index']
  #allocation1 [shape = 'u32[144,128]{1,0:T(1,128)}', space=vmem, size = 0x12000, scoped, tag = 'internal scratch']
  %s0 = inlined_call_operand.hbm [shape: f32[3,8,8], index: 0, kind: input, shape index: {}]
  %s1 = inlined_call_operand.hbm [shape: f32[2,2,8,256], index: 1, kind: input, shape index: {}]
  %s2 = inlined_call_operand.hbm [shape: f32[2,2,8,256], index: 2, kind: input, shape index: {}]
  %s3 = inlined_call_operand.vmem [shape: f32[2,1,8,2], index: 3, kind: output, shape index: {}]
  %s4 = sld [smem:[#allocation0]]
  $region57: #{tpu_custom_call.1} parent=0
    _
  %s6 = ssub.s32 1, %s4
  %s7 = scalar_select 0, %s6, %s4
  $region1: #{tpu_custom_call.1} parent=0
    #allocation2 [shape = 'u8[12288]{0}', space=vmem, size = 0x3000, scoped, tag = 'input window, operand 0, single buffered']
    #allocation3 [shape = 's32[2]{0}', space=sflag, size = 0x8, scoped, tag = 'scoped memory for tpu_custom_call.1']
    #allocation4 [shape = 'u8[16384]{0}', space=vmem, size = 0x4000, scoped, tag = 'input window, operand 1']
    #allocation5 [shape = 's32[2]{0}', space=sflag, size = 0x8, scoped, tag = 'scoped memory for tpu_custom_call.1']
    #allocation6 [shape = 'u8[16384]{0}', space=vmem, size = 0x4000, scoped, tag = 'input window, operand 2']
    %8 = vsyncpa [#allocation3], 0
    %9 = vsyncpa [#allocation5], 0
    %s10 = scalar_lea.sflag [#allocation5], 1
    %11 = vsyncpa %s10, 0
    loop: start=0, step=1, limit=4
    $region2: #{tpu_custom_call.1} parent=1 // loop_pre_header
      _
    $region3: #{tpu_custom_call.1} parent=1 // loop_header
      %s13 = sphi 0, %s17
      %p14 = scmp.ge.s32.totalorder %s13, 4
      %s20 = sphi 0, %s32
      %s21 = sphi 0, %s28
      %s22 = sphi 0, %s20
      %s23 = sphi 0, %s21
      %s24 = sphi 0, %s22
      %s25 = sphi 0, %s23
      %s33 = sphi 0, %s33
      %s35 = sphi 0, %s33
      %s36 = sphi 0, %s35
      %s50 = sphi 0, %s36
      %s58 = sphi 0, %s60
      %s61 = sphi 0, %s58
      %s62 = sphi 0, %s61
      %s78 = sphi 0, %s62
      %s88 = sphi 0, %s90
      %s91 = sphi 0, %s88
      %s92 = sphi 0, %s91
      %s108 = sphi 0, %s92
      %s116 = sphi 0, %s118
      %s119 = sphi 0, %s116
      %s120 = sphi 0, %s119
      %s136 = sphi 0, %s120
    $region4: #{tpu_custom_call.1} parent=1 // loop_header_branch
      %16 = sbr.rel (%p14) target = $region8
    $region5: #{tpu_custom_call.1} parent=1 // loop_body
      %s18 = ssub.s32 %s13, 1
      %s19 = ssub.s32 %s13, 2
      %s26 = sadd.s32 1, %s21
      %p27 = scmp.ge.s32.totalorder %s26, 1
      %s28 = scalar_select %p27, 0, %s26
      %s29 = sadd.s32 1, %s20
      %s30 = scalar_select %p27, %s29, %s20
      %p31 = scmp.ge.s32.totalorder %s30, 2
      %s32 = scalar_select %p31, 0, %s30
      %s34 = sadd.s32 %s33, 1
      %p37 = scmp.eq.s32.totalorder %s13, 1
      %p38 = scmp.ne.s32.totalorder %s33, %s35
      %p39 = scmp.eq.s32.totalorder %s13, 0
      %p40 = por %p38, %p39
      %p41 = scmp.ne.s32.totalorder %s33, %s35
      %p42 = scmp.eq.s32.totalorder %s18, 1
      %p43 = por %p41, %p42
      %p44 = scmp.ne.s32.totalorder %s35, %s36
      %p45 = scmp.eq.s32.totalorder %s18, 0
      %p46 = por %p44, %p45
      %p47 = scmp.ne.s32.totalorder %s35, %s36
      %p48 = scmp.eq.s32.totalorder %s19, 1
      %p49 = por %p47, %p48
      %p51 = scmp.ne.s32.totalorder %s36, %s50
      %p52 = scmp.eq.s32.totalorder %s19, 0
      %p53 = por %p51, %p52
      %s54 = ssub.s32 %s20, %s32
      %s55 = ssub.s32 %s21, %s28
      %s56 = sor.u32 %s54, %s55
      %p57 = scmp.eq.s32.totalorder %s56, 0
      %s59 = sadd.s32 %s58, 1
      %s60 = scalar_select %p57, %s58, %s59
      %p63 = pneg %p57
      %p64 = scmp.eq.s32.totalorder %s13, 1
      %p65 = por %p63, %p64
      %p66 = scmp.ne.s32.totalorder %s58, %s61
      %p67 = scmp.eq.s32.totalorder %s13, 0
      %p68 = por %p66, %p67
      %p69 = scmp.ne.s32.totalorder %s58, %s61
      %p70 = scmp.eq.s32.totalorder %s18, 1
      %p71 = por %p69, %p70
      %p72 = scmp.ne.s32.totalorder %s61, %s62
      %p73 = scmp.eq.s32.totalorder %s18, 0
      %p74 = por %p72, %p73
      %p75 = scmp.ne.s32.totalorder %s61, %s62
      %p76 = scmp.eq.s32.totalorder %s19, 1
      %p77 = por %p75, %p76
      %p79 = scmp.ne.s32.totalorder %s62, %s78
      %p80 = scmp.eq.s32.totalorder %s19, 0
      %p81 = por %p79, %p80
      %s82 = sadd.s32 %s21, 1
      %s83 = sadd.s32 %s28, 1
      %s84 = ssub.s32 %s20, %s32
      %s85 = ssub.s32 %s82, %s83
      %s86 = sor.u32 %s84, %s85
      %p87 = scmp.eq.s32.totalorder %s86, 0
      %s89 = sadd.s32 %s88, 1
      %s90 = scalar_select %p87, %s88, %s89
      %p93 = pneg %p87
      %p94 = scmp.eq.s32.totalorder %s13, 1
      %p95 = por %p93, %p94
      %p96 = scmp.ne.s32.totalorder %s88, %s91
      %p97 = scmp.eq.s32.totalorder %s13, 0
      %p98 = por %p96, %p97
      %p99 = scmp.ne.s32.totalorder %s88, %s91
      %p100 = scmp.eq.s32.totalorder %s18, 1
      %p101 = por %p99, %p100
      %p102 = scmp.ne.s32.totalorder %s91, %s92
      %p103 = scmp.eq.s32.totalorder %s18, 0
      %p104 = por %p102, %p103
      %p105 = scmp.ne.s32.totalorder %s91, %s92
      %p106 = scmp.eq.s32.totalorder %s19, 1
      %p107 = por %p105, %p106
      %p109 = scmp.ne.s32.totalorder %s92, %s108
      %p110 = scmp.eq.s32.totalorder %s19, 0
      %p111 = por %p109, %p110
      %s112 = ssub.s32 %s20, %s32
      %s113 = ssub.s32 %s21, %s28
      %s114 = sor.u32 %s112, %s113
      %p115 = scmp.eq.s32.totalorder %s114, 0
      %s117 = sadd.s32 %s116, 1
      %s118 = scalar_select %p115, %s116, %s117
      %p121 = pneg %p115
      %p122 = scmp.eq.s32.totalorder %s13, 1
      %p123 = por %p121, %p122
      %p124 = scmp.ne.s32.totalorder %s116, %s119
      %p125 = scmp.eq.s32.totalorder %s13, 0
      %p126 = por %p124, %p125
      %p127 = scmp.ne.s32.totalorder %s116, %s119
      %p128 = scmp.eq.s32.totalorder %s18, 1
      %p129 = por %p127, %p128
      %p130 = scmp.ne.s32.totalorder %s119, %s120
      %p131 = scmp.eq.s32.totalorder %s18, 0
      %p132 = por %p130, %p131
      %p133 = scmp.ne.s32.totalorder %s119, %s120
      %p134 = scmp.eq.s32.totalorder %s19, 1
      %p135 = por %p133, %p134
      %p137 = scmp.ne.s32.totalorder %s120, %s136
      %p138 = scmp.eq.s32.totalorder %s19, 0
      %p139 = por %p137, %p138
      %p140 = scmp.le.s32.totalorder 1, %s13
      %p141 = scmp.lt.s32.totalorder %s13, 3
      %p142 = pnand %p140, %p141
      %p143 = pneg %p142
      // Predicated region
      $region9: #{tpu_custom_call.1} parent=5 // pred_check
        _
      $region10: #{tpu_custom_call.1} parent=5 // pred_check_branch
        %145 = sbr.rel (%p142) target = $region12
      $region11: #{tpu_custom_call.1} parent=5 // pred_region
        %s146 = ssub.s32 %s13, 1
        // Predicated region
        $region13: #{tpu_custom_call.1} parent=11 // pred_check
          %p147 = pneg %p46
        $region14: #{tpu_custom_call.1} parent=11 // pred_check_branch
          %149 = sbr.rel (%p147) target = $region16
        $region15: #{tpu_custom_call.1} parent=11 // pred_region
          %s151 = ssub.s32 384, 384
          %152 = vsyncadd [#allocation3], %s151
          %s153 = sshll.u32 [#allocation2], 4
          %s154 = int_to_ptr.vmem [resolvable:$true] %s153
          %159 = dma.hbm_to_vmem [thread:$0]  %s0, 384, %s154, [#allocation3], 128, 128, 8
        $region16: #{tpu_custom_call.1} parent=11 // pred_fallthru
          _
      $region12: #{tpu_custom_call.1} parent=5 // pred_fallthru
        _
      %p160 = scmp.lt.s32.totalorder %s13, 2
      // Predicated region
      $region17: #{tpu_custom_call.1} parent=5 // pred_check
        %p161 = pneg %p160
      $region18: #{tpu_custom_call.1} parent=5 // pred_check_branch
        %163 = sbr.rel (%p161) target = $region20
      $region19: #{tpu_custom_call.1} parent=5 // pred_region
        // Predicated region
        $region21: #{tpu_custom_call.1} parent=19 // pred_check
          %p164 = pneg %p68
        $region22: #{tpu_custom_call.1} parent=19 // pred_check_branch
          %166 = sbr.rel (%p164) target = $region24
        $region23: #{tpu_custom_call.1} parent=19 // pred_region
          %s167 = sand.u32 %s13, 1
          %s168 = scalar_lea.sflag [#allocation5], %s167
          %s169 = sand.u32 %s58, 1
          %s170 = smul.addr %s169, 16
          %s171 = scalar_lea.vmem [#allocation4], %s170
          %s173 = ssub.s32 256, 256
          %174 = vsyncadd %s168, %s173
          %s175 = smul.addr %s20, 4
          %s176 = sadd.s32 %s21, %s175
          %s177 = smul.addr %s176, 128
          %s178 = scalar_lea.hbm %s1, %s177
          %s179 = sshll.u32 %s171, 4
          %s180 = int_to_ptr.vmem [resolvable:$true] %s179
          %185 = dma.hbm_to_vmem [thread:$0]  %s178, 256, %s180, %s168, 256, 128, 8
        $region24: #{tpu_custom_call.1} parent=19 // pred_fallthru
          _
        // Predicated region
        $region25: #{tpu_custom_call.1} parent=19 // pred_check
          %p186 = pneg %p98
        $region26: #{tpu_custom_call.1} parent=19 // pred_check_branch
          %188 = sbr.rel (%p186) target = $region28
        $region27: #{tpu_custom_call.1} parent=19 // pred_region
          %s189 = sand.u32 %s13, 1
          %s190 = scalar_lea.sflag [#allocation5], %s189
          %s191 = sand.u32 %s88, 1
          %s192 = smul.addr %s191, 16
          %s193 = scalar_lea.vmem [#allocation6], %s192
          %s194 = sadd.s32 %s21, 1
          %s196 = ssub.s32 256, 256
          %197 = vsyncadd %s190, %s196
          %s198 = smul.addr %s20, 4
          %s199 = sadd.s32 %s194, %s198
          %s200 = smul.addr %s199, 128
          %s201 = scalar_lea.hbm %s2, %s200
          %s202 = sshll.u32 %s193, 4
          %s203 = int_to_ptr.vmem [resolvable:$true] %s202
          %208 = dma.hbm_to_vmem [thread:$0]  %s201, 256, %s203, %s190, 256, 128, 8
        $region28: #{tpu_custom_call.1} parent=19 // pred_fallthru
          _
      $region20: #{tpu_custom_call.1} parent=5 // pred_fallthru
        _
      %p209 = scmp.le.s32.totalorder 1, %s13
      %p210 = scmp.lt.s32.totalorder %s13, 3
      %p211 = pnand %p209, %p210
      %p212 = pneg %p211
      // Predicated region
      $region29: #{tpu_custom_call.1} parent=5 // pred_check
        _
      $region30: #{tpu_custom_call.1} parent=5 // pred_check_branch
        %214 = sbr.rel (%p211) target = $region32
      $region31: #{tpu_custom_call.1} parent=5 // pred_region
        %s215 = ssub.s32 %s13, 1
        // Predicated region
        $region33: #{tpu_custom_call.1} parent=31 // pred_check
          %p216 = pneg %p46
        $region34: #{tpu_custom_call.1} parent=31 // pred_check_branch
          %218 = sbr.rel (%p216) target = $region36
        $region35: #{tpu_custom_call.1} parent=31 // pred_region
          %219 = dma.done [#allocation3], 384
        $region36: #{tpu_custom_call.1} parent=31 // pred_fallthru
          _
        %s220 = sand.u32 %s18, 1
        %s221 = scalar_lea.sflag [#allocation5], %s220
        %s222 = sand.u32 %s61, 1
        %s223 = smul.addr %s222, 16
        %s224 = scalar_lea.vmem [#allocation4], %s223
        // Predicated region
        $region37: #{tpu_custom_call.1} parent=31 // pred_check
          %p225 = pneg %p74
        $region38: #{tpu_custom_call.1} parent=31 // pred_check_branch
          %227 = sbr.rel (%p225) target = $region40
        $region39: #{tpu_custom_call.1} parent=31 // pred_region
          %228 = dma.done %s221, 256
        $region40: #{tpu_custom_call.1} parent=31 // pred_fallthru
          _
        %s229 = sand.u32 %s18, 1
        %s230 = scalar_lea.sflag [#allocation5], %s229
        %s231 = sand.u32 %s91, 1
        %s232 = smul.addr %s231, 16
        %s233 = scalar_lea.vmem [#allocation6], %s232
        // Predicated region
        $region41: #{tpu_custom_call.1} parent=31 // pred_check
          %p234 = pneg %p104
        $region42: #{tpu_custom_call.1} parent=31 // pred_check_branch
          %236 = sbr.rel (%p234) target = $region44
        $region43: #{tpu_custom_call.1} parent=31 // pred_region
          %237 = dma.done %s230, 256
        $region44: #{tpu_custom_call.1} parent=31 // pred_fallthru
          _
        %p238 = pneg %p46
        %p239 = pneg %p43
        %s240 = sand.u32 %s18, 1
        %s241 = scalar_lea.sflag [#allocation5], %s240
        %s242 = sand.u32 %s61, 1
        %s243 = smul.addr %s242, 16
        %s244 = scalar_lea.vmem [#allocation4], %s243
        %p245 = pneg %p74
        %p246 = pneg %p71
        %s247 = sand.u32 %s18, 1
        %s248 = scalar_lea.sflag [#allocation5], %s247
        %s249 = sand.u32 %s91, 1
        %s250 = smul.addr %s249, 16
        %s251 = scalar_lea.vmem [#allocation6], %s250
        %p252 = pneg %p104
        %p253 = pneg %p101
        %p254 = pneg %p132
        %p255 = pneg %p129
        %p256 = scmp.lt.s32.totalorder %s22, 1
        %s257 = scalar_select %p256, %s22, 1
        %p258 = scmp.lt.s32.totalorder %s23, 0
        %s259 = scalar_select %p258, %s23, 0
        %s260 = sadd.s32 %s259, %s257
        %s261 = smul.addr %s260, 8
        %s262 = scalar_lea.vmem %s3, %s261
        %s263 = sadd.s32 %s23, 1
        %p264 = scmp.lt.s32.totalorder %s22, 1
        %s265 = scalar_select %p264, %s22, 1
        %p266 = scmp.lt.s32.totalorder %s23, 0
        %s267 = scalar_select %p266, %s23, 0
        %s268 = sadd.s32 %s267, %s265
        %s269 = smul.addr %s268, 8
        %s270 = scalar_lea.vmem %s3, %s269
        %v271 = vld [vmem:[%s224] sm:$0xff]
        %v272 = vld [vmem:[%s233] sm:$0xff]
        %v273 = vld [vmem:[#allocation2] sm:$0xff]
        %274 = vrot.lane.b32.xlu0 %v271, 127
        %v275 = vpop.permute.xlu0 %274
        %276 = vrot.lane.b32.xlu0 %v272, 127
        %v277 = vpop.permute.xlu0 %276
        %v278 = vlaneseq
        %v279 = vand.u32 %v278, 127
        %vm280 = vcmp.lt.s32.totalorder %v279, 127
        %v281 = vsel %vm280, %v275, %v277
        %s282 = scalar_lea.vmem [#allocation2], 16
        %v283 = vld [vmem:[%s282] sm:$0xff]
        %vm284 = vcmask 64512
        %v286 = vsel %vm284, %v283, 0
        %288 = vmatprep.subr.mxu0 0.0
        %289 = vmatpush1.msra.mxu0 %v281
        %290 = vmatprep.subr.mxu0 0.0
        %291 = vmatpush1.msra.mxu0 0.0
        %292 = vmatprep.subr.mxu0 0.0
        %293 = vmatpush1.msra.mxu0 0.0
        %294 = vmatprep.subr.mxu0 0.0
        %295 = vmatpush1.msra.mxu0 0.0
        %296 = vmatprep.subr.mxu0 0.0
        %297 = vmatpush1.msra.mxu0 0.0
        %298 = vmatprep.subr.mxu0 0.0
        %299 = vmatpush1.msra.mxu0 0.0
        %300 = vmatprep.subr.mxu0 0.0
        %301 = vmatpush1.msra.mxu0 0.0
        %302 = vmatprep.subr.mxu0 0.0
        %303 = vmatpush1.msra.mxu0 0.0
        %304 = vmatprep.subr.mxu0 0.0
        %305 = vmatpush1.msra.mxu0 0.0
        %306 = vmatprep.subr.mxu0 0.0
        %307 = vmatpush1.msra.mxu0 0.0
        %308 = vmatprep.subr.mxu0 0.0
        %309 = vmatpush1.msra.mxu0 0.0
        %310 = vmatprep.subr.mxu0 0.0
        %311 = vmatpush1.msra.mxu0 0.0
        %312 = vmatprep.subr.mxu0 0.0
        %313 = vmatpush1.msra.mxu0 0.0
        %314 = vmatprep.subr.mxu0 0.0
        %315 = vmatpush1.msra.mxu0 0.0
        %316 = vmatprep.subr.mxu0 0.0
        %317 = vmatpush1.msra.mxu0 0.0
        %318 = vmatprep.subr.mxu0 0.0
        %319 = vmatpush1.msra.mxu0 0.0
        %320 = vmatprep.subr.mxu0 0.0
        %321 = vmatpush1.msra.mxu0 0.0
        %322 = vmatprep.subr.mxu0 0.0
        %323 = vmatpush1.msra.mxu0 0.0
        %324 = vmatprep.subr.mxu0 0.0
        %325 = vmatpush1.msra.mxu0 0.0
        %326 = vmatprep.subr.mxu0 0.0
        %327 = vmatpush1.msra.mxu0 0.0
        %328 = vmatprep.subr.mxu0 0.0
        %329 = vmatpush1.msra.mxu0 0.0
        %330 = vmatprep.subr.mxu0 0.0
        %331 = vmatpush1.msra.mxu0 0.0
        %332 = vmatprep.subr.mxu0 0.0
        %333 = vmatpush1.msra.mxu0 0.0
        %334 = vmatprep.subr.mxu0 0.0
        %335 = vmatpush1.msra.mxu0 0.0
        %336 = vmatprep.subr.mxu0 0.0
        %337 = vmatpush1.msra.mxu0 0.0
        %338 = vmatprep.subr.mxu0 0.0
        %339 = vmatpush1.msra.mxu0 0.0
        %340 = vmatprep.subr.mxu0 0.0
        %341 = vmatpush1.msra.mxu0 0.0
        %342 = vmatprep.subr.mxu0 0.0
        %343 = vmatpush1.msra.mxu0 0.0
        %344 = vmatprep.subr.mxu0 0.0
        %345 = vmatpush1.msra.mxu0 0.0
        %346 = vmatprep.subr.mxu0 0.0
        %347 = vmatpush1.msra.mxu0 0.0
        %348 = vmatprep.subr.mxu0 0.0
        %349 = vmatpush1.msra.mxu0 0.0
        %350 = vmatprep.subr.mxu0 0.0
        %351 = vmatpush1.msra.mxu0 0.0
        %352 = vmatprep.mubr.f32.mxu0 0.0
        %353 = vmatmul.mubr.f32.gmra.mrb[0].mxu0 %v286
        %v354 = vpop.f32.mrb[0].mxu0
        %v355 = vadd.f32 0.0, %v354
        %v356 = vpop.f32.mrb[0].mxu0
        %357 = vdwg.mxu0
        %v359 = vsel %vm284, %v273, 0
        %361 = vmatprep.subr.mxu0 0.0
        %362 = vmatpush1.msra.mxu0 %v271
        %363 = vmatprep.subr.mxu0 0.0
        %364 = vmatpush1.msra.mxu0 0.0
        %365 = vmatprep.subr.mxu0 0.0
        %366 = vmatpush1.msra.mxu0 0.0
        %367 = vmatprep.subr.mxu0 0.0
        %368 = vmatpush1.msra.mxu0 0.0
        %369 = vmatprep.subr.mxu0 0.0
        %370 = vmatpush1.msra.mxu0 0.0
        %371 = vmatprep.subr.mxu0 0.0
        %372 = vmatpush1.msra.mxu0 0.0
        %373 = vmatprep.subr.mxu0 0.0
        %374 = vmatpush1.msra.mxu0 0.0
        %375 = vmatprep.subr.mxu0 0.0
        %376 = vmatpush1.msra.mxu0 0.0
        %377 = vmatprep.subr.mxu0 0.0
        %378 = vmatpush1.msra.mxu0 0.0
        %379 = vmatprep.subr.mxu0 0.0
        %380 = vmatpush1.msra.mxu0 0.0
        %381 = vmatprep.subr.mxu0 0.0
        %382 = vmatpush1.msra.mxu0 0.0
        %383 = vmatprep.subr.mxu0 0.0
        %384 = vmatpush1.msra.mxu0 0.0
        %385 = vmatprep.subr.mxu0 0.0
        %386 = vmatpush1.msra.mxu0 0.0
        %387 = vmatprep.subr.mxu0 0.0
        %388 = vmatpush1.msra.mxu0 0.0
        %389 = vmatprep.subr.mxu0 0.0
        %390 = vmatpush1.msra.mxu0 0.0
        %391 = vmatprep.subr.mxu0 0.0
        %392 = vmatpush1.msra.mxu0 0.0
        %393 = vmatprep.subr.mxu0 0.0
        %394 = vmatpush1.msra.mxu0 0.0
        %395 = vmatprep.subr.mxu0 0.0
        %396 = vmatpush1.msra.mxu0 0.0
        %397 = vmatprep.subr.mxu0 0.0
        %398 = vmatpush1.msra.mxu0 0.0
        %399 = vmatprep.subr.mxu0 0.0
        %400 = vmatpush1.msra.mxu0 0.0
        %401 = vmatprep.subr.mxu0 0.0
        %402 = vmatpush1.msra.mxu0 0.0
        %403 = vmatprep.subr.mxu0 0.0
        %404 = vmatpush1.msra.mxu0 0.0
        %405 = vmatprep.subr.mxu0 0.0
        %406 = vmatpush1.msra.mxu0 0.0
        %407 = vmatprep.subr.mxu0 0.0
        %408 = vmatpush1.msra.mxu0 0.0
        %409 = vmatprep.subr.mxu0 0.0
        %410 = vmatpush1.msra.mxu0 0.0
        %411 = vmatprep.subr.mxu0 0.0
        %412 = vmatpush1.msra.mxu0 0.0
        %413 = vmatprep.subr.mxu0 0.0
        %414 = vmatpush1.msra.mxu0 0.0
        %415 = vmatprep.subr.mxu0 0.0
        %416 = vmatpush1.msra.mxu0 0.0
        %417 = vmatprep.subr.mxu0 0.0
        %418 = vmatpush1.msra.mxu0 0.0
        %419 = vmatprep.subr.mxu0 0.0
        %420 = vmatpush1.msra.mxu0 0.0
        %421 = vmatprep.subr.mxu0 0.0
        %422 = vmatpush1.msra.mxu0 0.0
        %423 = vmatprep.subr.mxu0 0.0
        %424 = vmatpush1.msra.mxu0 0.0
        %425 = vmatprep.mubr.f32.mxu0 0.0
        %426 = vmatmul.mubr.f32.gmra.mrb[0].mxu0 %v359
        %v427 = vpop.f32.mrb[0].mxu0
        %v428 = vadd.f32 %v355, %v427
        %v429 = vpop.f32.mrb[0].mxu0
        %430 = vdwg.mxu0
        %s431 = scalar_lea.vmem %s224, 8 [#allocation4]
        %v432 = vld [vmem:[%s431] sm:$0xff]
        %s433 = scalar_lea.vmem [#allocation2], 8
        %v434 = vld [vmem:[%s433] sm:$0xff]
        %v436 = vsel %vm284, %v434, 0
        %438 = vmatprep.subr.mxu0 0.0
        %439 = vmatpush1.msra.mxu0 %v432
        %440 = vmatprep.subr.mxu0 0.0
        %441 = vmatpush1.msra.mxu0 0.0
        %442 = vmatprep.subr.mxu0 0.0
        %443 = vmatpush1.msra.mxu0 0.0
        %444 = vmatprep.subr.mxu0 0.0
        %445 = vmatpush1.msra.mxu0 0.0
        %446 = vmatprep.subr.mxu0 0.0
        %447 = vmatpush1.msra.mxu0 0.0
        %448 = vmatprep.subr.mxu0 0.0
        %449 = vmatpush1.msra.mxu0 0.0
        %450 = vmatprep.subr.mxu0 0.0
        %451 = vmatpush1.msra.mxu0 0.0
        %452 = vmatprep.subr.mxu0 0.0
        %453 = vmatpush1.msra.mxu0 0.0
        %454 = vmatprep.subr.mxu0 0.0
        %455 = vmatpush1.msra.mxu0 0.0
        %456 = vmatprep.subr.mxu0 0.0
        %457 = vmatpush1.msra.mxu0 0.0
        %458 = vmatprep.subr.mxu0 0.0
        %459 = vmatpush1.msra.mxu0 0.0
        %460 = vmatprep.subr.mxu0 0.0
        %461 = vmatpush1.msra.mxu0 0.0
        %462 = vmatprep.subr.mxu0 0.0
        %463 = vmatpush1.msra.mxu0 0.0
        %464 = vmatprep.subr.mxu0 0.0
        %465 = vmatpush1.msra.mxu0 0.0
        %466 = vmatprep.subr.mxu0 0.0
        %467 = vmatpush1.msra.mxu0 0.0
        %468 = vmatprep.subr.mxu0 0.0
        %469 = vmatpush1.msra.mxu0 0.0
        %470 = vmatprep.subr.mxu0 0.0
        %471 = vmatpush1.msra.mxu0 0.0
        %472 = vmatprep.subr.mxu0 0.0
        %473 = vmatpush1.msra.mxu0 0.0
        %474 = vmatprep.subr.mxu0 0.0
        %475 = vmatpush1.msra.mxu0 0.0
        %476 = vmatprep.subr.mxu0 0.0
        %477 = vmatpush1.msra.mxu0 0.0
        %478 = vmatprep.subr.mxu0 0.0
        %479 = vmatpush1.msra.mxu0 0.0
        %480 = vmatprep.subr.mxu0 0.0
        %481 = vmatpush1.msra.mxu0 0.0
        %482 = vmatprep.subr.mxu0 0.0
        %483 = vmatpush1.msra.mxu0 0.0
        %484 = vmatprep.subr.mxu0 0.0
        %485 = vmatpush1.msra.mxu0 0.0
        %486 = vmatprep.subr.mxu0 0.0
        %487 = vmatpush1.msra.mxu0 0.0
        %488 = vmatprep.subr.mxu0 0.0
        %489 = vmatpush1.msra.mxu0 0.0
        %490 = vmatprep.subr.mxu0 0.0
        %491 = vmatpush1.msra.mxu0 0.0
        %492 = vmatprep.subr.mxu0 0.0
        %493 = vmatpush1.msra.mxu0 0.0
        %494 = vmatprep.subr.mxu0 0.0
        %495 = vmatpush1.msra.mxu0 0.0
        %496 = vmatprep.subr.mxu0 0.0
        %497 = vmatpush1.msra.mxu0 0.0
        %498 = vmatprep.subr.mxu0 0.0
        %499 = vmatpush1.msra.mxu0 0.0
        %500 = vmatprep.subr.mxu0 0.0
        %501 = vmatpush1.msra.mxu0 0.0
        %502 = vmatprep.mubr.f32.mxu0 0.0
        %503 = vmatmul.mubr.f32.gmra.mrb[0].mxu0 %v436
        %v504 = vpop.f32.mrb[0].mxu0
        %v505 = vadd.f32 0.0, %v504
        %v506 = vpop.f32.mrb[0].mxu0
        %507 = vdwg.mxu0
        %v508 = vadd.f32 %v428, %v505
        %s509 = smul.u32 %s23, 128
        %s510 = ssub.s32 7, %s509
        %p511 = scmp.lt.s32.totalorder %s510, 128
        %s512 = scalar_select %p511, %s510, 128
        %s513 = scvt.s32.f32 %s512
        %v514 = vstv %s510
        %vm515 = vcmp.lt.s32.totalorder %v279, %v514
        %v516 = vsel %vm515, 1, 0
        %vm517 = vcmp.eq.s32.totalorder %v516, 1
        %v518 = vsel %vm517, %v508, 0.0
        %519 = vadd.xlane.f32.xlu0 %v518
        %v520 = vpop.xlane.xlu0 %519
        %v521 = vstv %s513
        %v522 = vrcp.pop %v521
        %v523 = vmul.f32 %v520, %v522
        %v524 = vsub.f32 %v508, %v523
        %v525 = vsel %vm517, %v524, 0.0
        %v526 = vmul.f32 %v525, %v525
        %527 = vadd.xlane.f32.xlu0 %v526
        %v528 = vpop.xlane.xlu0 %527
        %vm529 = vcmask 7168
        %v530 = vsel %vm529, %v520, %v528
        %vm531 = vcmask 15360
        %532 = vst.msk [vmem:[%s270] sm:$0xff] %vm531, %v530
        %p533 = scmp.lt.s32.totalorder %s22, 1
        %s534 = scalar_select %p533, %s22, 1
        %p535 = scmp.lt.s32.totalorder %s23, 0
        %s536 = scalar_select %p535, %s23, 0
        %s537 = sadd.s32 %s536, %s534
        %s538 = smul.addr %s537, 8
        %s539 = scalar_lea.vmem %s3, %s538
        // Predicated region
        $region45: #{tpu_custom_call.1} parent=31 // pred_check
          %p540 = pneg %p129
        $region46: #{tpu_custom_call.1} parent=31 // pred_check_branch
          %542 = sbr.rel (%p540) target = $region48
        $region47: #{tpu_custom_call.1} parent=31 // pred_region
          _
        $region48: #{tpu_custom_call.1} parent=31 // pred_fallthru
          _
      $region32: #{tpu_custom_call.1} parent=5 // pred_fallthru
        _
      %p543 = scmp.le.s32.totalorder 2, %s13
      // Predicated region
      $region49: #{tpu_custom_call.1} parent=5 // pred_check
        %p544 = pneg %p543
      $region50: #{tpu_custom_call.1} parent=5 // pred_check_branch
        %546 = sbr.rel (%p544) target = $region52
      $region51: #{tpu_custom_call.1} parent=5 // pred_region
        %s547 = ssub.s32 %s13, 2
        // Predicated region
        $region53: #{tpu_custom_call.1} parent=51 // pred_check
          %p548 = pneg %p135
        $region54: #{tpu_custom_call.1} parent=51 // pred_check_branch
          %550 = sbr.rel (%p548) target = $region56
        $region55: #{tpu_custom_call.1} parent=51 // pred_region
          %p551 = scmp.lt.s32.totalorder %s24, 1
          %s552 = scalar_select %p551, %s24, 1
          %p553 = scmp.lt.s32.totalorder %s25, 0
          %s554 = scalar_select %p553, %s25, 0
          %s555 = sadd.s32 %s554, %s552
          %s556 = smul.addr %s555, 8
          %s557 = scalar_lea.vmem %s3, %s556
        $region56: #{tpu_custom_call.1} parent=51 // pred_fallthru
          _
      $region52: #{tpu_custom_call.1} parent=5 // pred_fallthru
        _
    $region6: #{tpu_custom_call.1} parent=1 // loop_footer
      %s17 = sadd.s32 1, %s13
    $region7: #{tpu_custom_call.1} parent=1 // loop_footer_branch
      %12 = sbr.rel target = $region3
    $region8: #{tpu_custom_call.1} parent=1 // loop_exit
      _
    %558 = vsyncpa [#allocation3], 1
    %s559 = scalar_lea.sflag [#allocation3], 1
    %560 = vsyncpa %s559, 1
    %561 = vsyncpa [#allocation5], 1
    %s562 = scalar_lea.sflag [#allocation5], 1
    %563 = vsyncpa %s562, 1

</llo_original>
